<compile_context>
chip_gen: v5e
topology: v5e:2x2
jax: 0.10.0
libtpu: 0.0.40
codegen_flags: <defaults>
</compile_context>

<pallas_src>
import functools

import jax
import jax.numpy as jnp
from jax.experimental import pallas as pl
from jax.experimental.pallas import tpu as pltpu


def _round_up(x, m):
    return (x + m - 1) // m * m


def _highway_kernel(x_ref, w_ref, b_ref, o_ref, *, out_feat, projection):
    """One fused highway layer on a (block_b, in_feat) tile.

    w_ref holds [Wt | Wg | (Wp)] concatenated along the output axis;
    b_ref holds [bt | bg | (0)] broadcast over rows.
    """
    x = x_ref[...]
    # Single MXU matmul for trans / gate / (proj), f32 accumulation.
    y = jnp.dot(x, w_ref[...], preferred_element_type=jnp.float32) + b_ref[...]
    trans = jnp.maximum(y[:, :out_feat], 0.0)
    gate = jax.nn.sigmoid(y[:, out_feat:2 * out_feat])
    if projection:
        carry = y[:, 2 * out_feat:3 * out_feat]
    else:
        carry = x.astype(jnp.float32)
    # trans*gate + (1-gate)*carry == carry + gate*(trans - carry)
    o_ref[...] = (carry + gate * (trans - carry)).astype(o_ref.dtype)


def _pick_block_b(n_rows, requested):
    """Choose a batch tile: multiple of 8, >= 2 grid steps when possible."""
    rows_pad = _round_up(max(n_rows, 1), 8)
    bb = max(8, min(_round_up(requested, 8), rows_pad))
    # Keep at least 2 grid steps so both v7x TensorCores are used.
    if rows_pad // bb < 2 and rows_pad >= 16:
        bb = _round_up(pl.cdiv(rows_pad, 2), 8)
    grid_b = pl.cdiv(rows_pad, bb)
    return bb, grid_b


def highway_layer(x, params, *, block_b=256, compute_dtype=None):
    """Apply one highway layer to 2-D activations x: (rows, in_feat).

    params: dict with
      'wt' (in_feat, out_feat), 'bt' (out_feat,),
      'wg' (in_feat, out_feat), 'bg' (out_feat,),
      optional 'wp' (in_feat, out_feat)  -- present iff in_feat != out_feat.
    compute_dtype: optional dtype (e.g. jnp.bfloat16) for matmul operands;
      accumulation stays f32, output keeps x.dtype.
    """
    rows, in_feat = x.shape
    out_feat = params["wt"].shape[1]
    projection = "wp" in params
    out_dtype = x.dtype
    cdt = jnp.dtype(compute_dtype) if compute_dtype is not None else jnp.dtype(x.dtype)

    # Pack weights/biases: one (in_feat, n_cols) matmul instead of three.
    if projection:
        w = jnp.concatenate([params["wt"], params["wg"], params["wp"]], axis=1)
        b = jnp.concatenate(
            [params["bt"], params["bg"], jnp.zeros_like(params["bt"])], axis=0)
    else:
        w = jnp.concatenate([params["wt"], params["wg"]], axis=1)
        b = jnp.concatenate([params["bt"], params["bg"]], axis=0)
    n_cols = w.shape[1]
    w = w.astype(cdt)
    b = b.reshape(1, n_cols).astype(jnp.float32)

    # Batch tiling with padding (no divisibility requirement on callers).
    bb, grid_b = _pick_block_b(rows, block_b)
    rows_pad = grid_b * bb
    xk = x.astype(cdt)
    if rows_pad != rows:
        xk = jnp.pad(xk, ((0, rows_pad - rows), (0, 0)))

    x_spec = pl.BlockSpec((bb, in_feat), lambda i: (i, 0))
    w_spec = pl.BlockSpec((in_feat, n_cols), lambda i: (0, 0))
    b_spec = pl.BlockSpec((1, n_cols), lambda i: (0, 0))
    o_spec = pl.BlockSpec((bb, out_feat), lambda i: (i, 0))

    kernel = functools.partial(
        _highway_kernel, out_feat=out_feat, projection=projection)

    # Advisory cost estimate for XLA scheduling.
    cost = pl.CostEstimate(
        flops=int(2 * rows_pad * in_feat * n_cols + 6 * rows_pad * out_feat),
        transcendentals=int(rows_pad * out_feat),  # sigmoid
        bytes_accessed=int(
            rows_pad * in_feat * cdt.itemsize
            + in_feat * n_cols * cdt.itemsize
            + n_cols * 4
            + rows_pad * out_feat * jnp.dtype(out_dtype).itemsize),
    )

    # Only raise the scoped-VMEM limit if this tiling actually needs it.
    est_vmem = (
        2 * (bb * in_feat * cdt.itemsize                      # x tile (double-buffered)
             + in_feat * n_cols * cdt.itemsize                # packed weight
             + n_cols * 4                                     # bias
             + bb * out_feat * jnp.dtype(out_dtype).itemsize)  # out tile
        + 2 * bb * n_cols * 4)                                 # f32 intermediate slab
    vmem_limit = None
    if est_vmem > 24 * 1024 * 1024:
        vmem_limit = int(min(2 * est_vmem, 96 * 1024 * 1024))

    out_pad = pl.pallas_call(
        kernel,
        out_shape=jax.ShapeDtypeStruct((rows_pad, out_feat), out_dtype),
        grid_spec=pltpu.PrefetchScalarGridSpec(
            num_scalar_prefetch=0,
            grid=(grid_b,),
            in_specs=[x_spec, w_spec, b_spec],
            out_specs=o_spec,
        ),
        compiler_params=pltpu.CompilerParams(
            dimension_semantics=("parallel",),
            vmem_limit_bytes=vmem_limit,
        ),
        cost_estimate=cost,
    )(xk, w, b)

    return out_pad[:rows] if rows_pad != rows else out_pad


def highway_encoder(x, layers_params, *, block_b=256, compute_dtype=None):
    """HighWayEncoder forward: stack of highway layers on x[..., in_feat]."""
    in_feat = x.shape[-1]
    h = x.reshape(-1, in_feat)
    for p in layers_params:
        h = highway_layer(h, p, block_b=block_b, compute_dtype=compute_dtype)
    return h.reshape(*x.shape[:-1], h.shape[-1])


# ------------------------- plain-JAX reference -------------------------------

def _highway_layer_reference(x, p):
    trans = jnp.maximum(x @ p["wt"] + p["bt"], 0.0)
    gate = jax.nn.sigmoid(x @ p["wg"] + p["bg"])
    carry = (x @ p["wp"]) if "wp" in p else x
    return trans * gate + (1.0 - gate) * carry


def highway_encoder_reference(x, layers_params):
    in_feat = x.shape[-1]
    h = x.reshape(-1, in_feat)
    for p in layers_params:
        h = _highway_layer_reference(h, p)
    return h.reshape(*x.shape[:-1], h.shape[-1])


# ------------------------------- init ----------------------------------------

def init_layer_params(key, in_feat, out_feat, dtype=jnp.float32):
    """nn.Linear-style init, weights pre-transposed to (in, out)."""
    k = jax.random.split(key, 5)
    scale = 1.0 / jnp.sqrt(in_feat)
    params = {
        "wt": jax.random.uniform(k[0], (in_feat, out_feat), dtype, -scale, scale),
        "bt": jax.random.uniform(k[1], (out_feat,), dtype, -scale, scale),
        "wg": jax.random.uniform(k[2], (in_feat, out_feat), dtype, -scale, scale),
        "bg": jax.random.uniform(k[3], (out_feat,), dtype, -scale, scale),
    }
    if in_feat != out_feat:
        params["wp"] = jax.random.uniform(
            k[4], (in_feat, out_feat), dtype, -scale, scale)
    return params


def init_encoder_params(key, in_feat, out_feat, num_layers, dtype=jnp.float32):
    keys = jax.random.split(key, num_layers)
    params = []
    for i in range(num_layers):
        fi = in_feat if i == 0 else out_feat
        params.append(init_layer_params(keys[i], fi, out_feat, dtype))
    return params


if __name__ == "__main__":
    key = jax.random.PRNGKey(0)
    kx, kx2, kp, kp2 = jax.random.split(key, 4)

    # HighWayEncoder(in_feat=32, out_feat=64, num_layers=2) on (batch=4, seq=8, 32).
    B, S, in_feat, out_feat, num_layers = 4, 8, 32, 64, 2
    x = jax.random.normal(kx, (B, S, in_feat), jnp.float32)
    params = init_encoder_params(kp, in_feat, out_feat, num_layers)

    out = highway_encoder(x, params)
    jax.block_until_ready(out)
    ref = highway_encoder_reference(x, params)
    assert out.shape == (B, S, out_feat)
    assert float(jnp.max(jnp.abs(out - ref))) < 1e-4

    # bf16 operand mode (f32 accumulation) -- looser tolerance.
    out_bf16 = highway_encoder(x, params, compute_dtype=jnp.bfloat16)
    jax.block_until_ready(out_bf16)
    assert out_bf16.shape == (B, S, out_feat)
    assert float(jnp.max(jnp.abs(out_bf16 - ref))) < 0.15

    # Ragged batch (exercises cdiv grid + padding) with identity-carry layer.
    x2 = jax.random.normal(kx2, (13, out_feat), jnp.float32)
    params2 = init_encoder_params(kp2, out_feat, out_feat, 1)
    out2 = highway_encoder(x2, params2)
    jax.block_until_ready(out2)
    ref2 = highway_encoder_reference(x2, params2)
    assert out2.shape == (13, out_feat)
    assert float(jnp.max(jnp.abs(out2 - ref2))) < 1e-4

    print("KERNEL_OK")
</pallas_src>

<mosaic_0001>
module attributes {stable_mosaic.version = 11 : i64} {
  func.func @_highway_kernel(%arg0: i32, %arg1: memref<16x32xf32, #tpu.memory_space<vmem>>, %arg2: memref<32x192xf32, #tpu.memory_space<vmem>>, %arg3: memref<1x192xf32, #tpu.memory_space<vmem>>, %arg4: memref<16x64xf32, #tpu.memory_space<vmem>>) attributes {dimension_semantics = [#tpu.dimension_semantics<parallel>], iteration_bounds = array<i64: 2>, scalar_prefetch = 0 : i64, scratch_operands = 0 : i64, tpu.core_type = #tpu.core_type<tc>, window_params = [{transform_indices = @transform_0, window_bounds = array<i64: 16, 32>}, {pipeline_mode = #tpu.pipeline_mode<synchronous>, transform_indices = @transform_1, window_bounds = array<i64: 32, 192>}, {pipeline_mode = #tpu.pipeline_mode<synchronous>, transform_indices = @transform_2, window_bounds = array<i64: 1, 192>}, {transform_indices = @transform_3, window_bounds = array<i64: 16, 64>}]} {
    %c0 = arith.constant 0 : index
    %c0_0 = arith.constant 0 : index
    %0 = vector.load %arg1[%c0, %c0_0] : memref<16x32xf32, #tpu.memory_space<vmem>>, vector<16x32xf32>
    %c0_1 = arith.constant 0 : index
    %c0_2 = arith.constant 0 : index
    %1 = vector.load %arg2[%c0_1, %c0_2] : memref<32x192xf32, #tpu.memory_space<vmem>>, vector<32x192xf32>
    %cst = arith.constant dense<0.000000e+00> : vector<16x192xf32>
    %2 = tpu.matmul %0, %1, %cst {dimension_numbers = #tpu.dot_dimension_numbers<[1], [0], [0], [1], [0, 0, 1, 1], [], []>} : vector<16x32xf32>, vector<32x192xf32>, vector<16x192xf32> -> vector<16x192xf32>
    %c0_3 = arith.constant 0 : index
    %c0_4 = arith.constant 0 : index
    %3 = vector.load %arg3[%c0_3, %c0_4] : memref<1x192xf32, #tpu.memory_space<vmem>>, vector<1x192xf32>
    %4 = vector.broadcast %3 : vector<1x192xf32> to vector<16x192xf32>
    %5 = arith.addf %2, %4 : vector<16x192xf32>
    %6 = vector.extract_strided_slice %5 {offsets = [0, 0], sizes = [16, 64], strides = [1, 1]} : vector<16x192xf32> to vector<16x64xf32>
    %cst_5 = arith.constant 0.000000e+00 : f32
    %7 = vector.broadcast %cst_5 : f32 to vector<16x64xf32>
    %8 = arith.maximumf %6, %7 : vector<16x64xf32>
    %9 = vector.extract_strided_slice %5 {offsets = [0, 64], sizes = [16, 64], strides = [1, 1]} : vector<16x192xf32> to vector<16x64xf32>
    %10 = arith.negf %9 : vector<16x64xf32>
    %11 = math.exp %10 : vector<16x64xf32>
    %cst_6 = arith.constant 1.000000e+00 : f32
    %12 = vector.broadcast %cst_6 : f32 to vector<16x64xf32>
    %13 = arith.addf %12, %11 : vector<16x64xf32>
    %14 = arith.divf %12, %13 : vector<16x64xf32>
    %15 = vector.extract_strided_slice %5 {offsets = [0, 128], sizes = [16, 64], strides = [1, 1]} : vector<16x192xf32> to vector<16x64xf32>
    %16 = arith.subf %8, %15 : vector<16x64xf32>
    %17 = arith.mulf %14, %16 : vector<16x64xf32>
    %18 = arith.addf %15, %17 : vector<16x64xf32>
    %c0_7 = arith.constant 0 : index
    %c0_8 = arith.constant 0 : index
    %19 = vector.load %arg4[%c0_7, %c0_8] : memref<16x64xf32, #tpu.memory_space<vmem>>, vector<16x64xf32>
    tpu.vector_store %arg4[%c0_7, %c0_8], %18 {strides = array<i32>} : memref<16x64xf32, #tpu.memory_space<vmem>>, vector<16x64xf32>,
    return
  }
  func.func @transform_0(%arg0: i32) -> (i32, i32) {
    %c0_i32 = arith.constant 0 : i32
    %c0_i32_0 = arith.constant 0 : i32
    return %arg0, %c0_i32 : i32, i32
  }
  func.func @transform_1(%arg0: i32) -> (i32, i32) {
    %c0_i32 = arith.constant 0 : i32
    %c0_i32_0 = arith.constant 0 : i32
    %c0_i32_1 = arith.constant 0 : i32
    return %c0_i32, %c0_i32_0 : i32, i32
  }
  func.func @transform_2(%arg0: i32) -> (i32, i32) {
    %c0_i32 = arith.constant 0 : i32
    %c0_i32_0 = arith.constant 0 : i32
    %c0_i32_1 = arith.constant 0 : i32
    return %c0_i32, %c0_i32_0 : i32, i32
  }
  func.func @transform_3(%arg0: i32) -> (i32, i32) {
    %c0_i32 = arith.constant 0 : i32
    %c0_i32_0 = arith.constant 0 : i32
    return %arg0, %c0_i32 : i32, i32
  }
}

</mosaic_0001>

<llo_original>
// kernel: tpu_custom_call.1
$region0: #{tpu_custom_call.1}
  #allocation0 [shape = 'u32[]', space=smem, size = 0x4, offset = 0x4, fixed_abs, tag = 'smem constant byte address 0x4 - core index']
  #allocation1 [shape = 'u32[72,128]{1,0:T(1,128)}', space=vmem, size = 0x9000, scoped, tag = 'internal scratch']
  %s0 = inlined_call_operand.hbm [shape: f32[32,32], index: 0, kind: input, shape index: {}]
  %s1 = inlined_call_operand.hbm [shape: f32[32,192], index: 1, kind: input, shape index: {}]
  %s2 = inlined_call_operand.hbm [shape: f32[1,192], index: 2, kind: input, shape index: {}]
  %s3 = inlined_call_operand.hbm [shape: f32[32,64], index: 3, kind: output, shape index: {}]
  %s4 = sld [smem:[#allocation0]]
  $region57: #{tpu_custom_call.1} parent=0
    _
  %s6 = ssub.s32 1, %s4
  %s7 = scalar_select 0, %s6, %s4
  $region1: #{tpu_custom_call.1} parent=0
    #allocation2 [shape = 'u8[16384]{0}', space=vmem, size = 0x4000, scoped, tag = 'input window, operand 0']
    #allocation3 [shape = 's32[2]{0}', space=sflag, size = 0x8, scoped, tag = 'scoped memory for tpu_custom_call.1']
    #allocation4 [shape = 's32[2]{0}', space=sflag, size = 0x8, scoped, tag = 'scoped memory for tpu_custom_call.1']
    #allocation5 [shape = 'u8[32768]{0}', space=vmem, size = 0x8000, scoped, tag = 'input window, operand 1, single buffered']
    #allocation6 [shape = 's32[1]{0}', space=sflag, size = 0x4, scoped, tag = 'scoped memory for tpu_custom_call.1']
    #allocation7 [shape = 'u8[1024]{0}', space=vmem, size = 0x400, scoped, tag = 'input window, operand 2, single buffered']
    #allocation8 [shape = 'u8[16384]{0}', space=vmem, size = 0x4000, scoped, tag = 'output window, operand 0']
    %8 = vsyncpa [#allocation3], 0
    %s9 = scalar_lea.sflag [#allocation3], 1
    %10 = vsyncpa %s9, 0
    %11 = vsyncpa [#allocation6], 0
    %12 = vsyncpa [#allocation4], 0
    %s13 = scalar_lea.sflag [#allocation4], 1
    %14 = vsyncpa %s13, 0
    loop: start=0, step=1, limit=4
    $region2: #{tpu_custom_call.1} parent=1 // loop_pre_header
      _
    $region3: #{tpu_custom_call.1} parent=1 // loop_header
      %s16 = sphi 0, %s20
      %p17 = scmp.ge.s32.totalorder %s16, 4
      %s26 = sphi 0, %s28
      %s29 = sphi 0, %s26
      %s30 = sphi 0, %s29
      %s46 = sphi 0, %s30
      %s50 = sphi 0, %s50
      %s52 = sphi 0, %s50
      %s53 = sphi 0, %s52
      %s67 = sphi 0, %s53
      %s71 = sphi 0, %s71
      %s73 = sphi 0, %s71
      %s74 = sphi 0, %s73
      %s88 = sphi 0, %s74
      %s94 = sphi 0, %s96
      %s97 = sphi 0, %s94
      %s98 = sphi 0, %s97
      %s114 = sphi 0, %s98
    $region4: #{tpu_custom_call.1} parent=1 // loop_header_branch
      %19 = sbr.rel (%p17) target = $region8
    $region5: #{tpu_custom_call.1} parent=1 // loop_body
      %s21 = ssub.s32 %s16, 1
      %s22 = ssub.s32 %s16, 2
      %s23 = sadd.s32 %s16, 1
      %s24 = ssub.s32 %s16, %s23
      %p25 = scmp.eq.s32.totalorder %s24, 0
      %s27 = sadd.s32 %s26, 1
      %s28 = scalar_select %p25, %s26, %s27
      %p31 = pneg %p25
      %p32 = scmp.eq.s32.totalorder %s16, 1
      %p33 = por %p31, %p32
      %p34 = scmp.ne.s32.totalorder %s26, %s29
      %p35 = scmp.eq.s32.totalorder %s16, 0
      %p36 = por %p34, %p35
      %p37 = scmp.ne.s32.totalorder %s26, %s29
      %p38 = scmp.eq.s32.totalorder %s21, 1
      %p39 = por %p37, %p38
      %p40 = scmp.ne.s32.totalorder %s29, %s30
      %p41 = scmp.eq.s32.totalorder %s21, 0
      %p42 = por %p40, %p41
      %p43 = scmp.ne.s32.totalorder %s29, %s30
      %p44 = scmp.eq.s32.totalorder %s22, 1
      %p45 = por %p43, %p44
      %p47 = scmp.ne.s32.totalorder %s30, %s46
      %p48 = scmp.eq.s32.totalorder %s22, 0
      %p49 = por %p47, %p48
      %s51 = sadd.s32 %s50, 1
      %p54 = scmp.eq.s32.totalorder %s16, 1
      %p55 = scmp.ne.s32.totalorder %s50, %s52
      %p56 = scmp.eq.s32.totalorder %s16, 0
      %p57 = por %p55, %p56
      %p58 = scmp.ne.s32.totalorder %s50, %s52
      %p59 = scmp.eq.s32.totalorder %s21, 1
      %p60 = por %p58, %p59
      %p61 = scmp.ne.s32.totalorder %s52, %s53
      %p62 = scmp.eq.s32.totalorder %s21, 0
      %p63 = por %p61, %p62
      %p64 = scmp.ne.s32.totalorder %s52, %s53
      %p65 = scmp.eq.s32.totalorder %s22, 1
      %p66 = por %p64, %p65
      %p68 = scmp.ne.s32.totalorder %s53, %s67
      %p69 = scmp.eq.s32.totalorder %s22, 0
      %p70 = por %p68, %p69
      %s72 = sadd.s32 %s71, 1
      %p75 = scmp.eq.s32.totalorder %s16, 1
      %p76 = scmp.ne.s32.totalorder %s71, %s73
      %p77 = scmp.eq.s32.totalorder %s16, 0
      %p78 = por %p76, %p77
      %p79 = scmp.ne.s32.totalorder %s71, %s73
      %p80 = scmp.eq.s32.totalorder %s21, 1
      %p81 = por %p79, %p80
      %p82 = scmp.ne.s32.totalorder %s73, %s74
      %p83 = scmp.eq.s32.totalorder %s21, 0
      %p84 = por %p82, %p83
      %p85 = scmp.ne.s32.totalorder %s73, %s74
      %p86 = scmp.eq.s32.totalorder %s22, 1
      %p87 = por %p85, %p86
      %p89 = scmp.ne.s32.totalorder %s74, %s88
      %p90 = scmp.eq.s32.totalorder %s22, 0
      %p91 = por %p89, %p90
      %s92 = ssub.s32 %s16, %s23
      %p93 = scmp.eq.s32.totalorder %s92, 0
      %s95 = sadd.s32 %s94, 1
      %s96 = scalar_select %p93, %s94, %s95
      %p99 = pneg %p93
      %p100 = scmp.eq.s32.totalorder %s16, 1
      %p101 = por %p99, %p100
      %p102 = scmp.ne.s32.totalorder %s94, %s97
      %p103 = scmp.eq.s32.totalorder %s16, 0
      %p104 = por %p102, %p103
      %p105 = scmp.ne.s32.totalorder %s94, %s97
      %p106 = scmp.eq.s32.totalorder %s21, 1
      %p107 = por %p105, %p106
      %p108 = scmp.ne.s32.totalorder %s97, %s98
      %p109 = scmp.eq.s32.totalorder %s21, 0
      %p110 = por %p108, %p109
      %p111 = scmp.ne.s32.totalorder %s97, %s98
      %p112 = scmp.eq.s32.totalorder %s22, 1
      %p113 = por %p111, %p112
      %p115 = scmp.ne.s32.totalorder %s98, %s114
      %p116 = scmp.eq.s32.totalorder %s22, 0
      %p117 = por %p115, %p116
      %p118 = scmp.le.s32.totalorder 1, %s16
      %p119 = scmp.lt.s32.totalorder %s16, 3
      %p120 = pnand %p118, %p119
      %p121 = pneg %p120
      // Predicated region
      $region9: #{tpu_custom_call.1} parent=5 // pred_check
        _
      $region10: #{tpu_custom_call.1} parent=5 // pred_check_branch
        %123 = sbr.rel (%p120) target = $region12
      $region11: #{tpu_custom_call.1} parent=5 // pred_region
        %s124 = ssub.s32 %s16, 1
        // Predicated region
        $region13: #{tpu_custom_call.1} parent=11 // pred_check
          %p125 = pneg %p63
        $region14: #{tpu_custom_call.1} parent=11 // pred_check_branch
          %127 = sbr.rel (%p125) target = $region16
        $region15: #{tpu_custom_call.1} parent=11 // pred_region
          %129 = vsyncadd [#allocation6], 0
          %s130 = sshll.u32 %s1, 4
          %s131 = int_to_ptr.hbm [resolvable:$true] %s130
          %s132 = sshll.u32 [#allocation5], 4
          %s133 = int_to_ptr.vmem [resolvable:$true] %s132
          %138 = dma.hbm_to_vmem [thread:$0]  %s131, 1024, %s133, [#allocation6], 256, 256, 16
        $region16: #{tpu_custom_call.1} parent=11 // pred_fallthru
          _
        // Predicated region
        $region17: #{tpu_custom_call.1} parent=11 // pred_check
          %p139 = pneg %p84
        $region18: #{tpu_custom_call.1} parent=11 // pred_check_branch
          %141 = sbr.rel (%p139) target = $region20
        $region19: #{tpu_custom_call.1} parent=11 // pred_region
          %143 = vsyncadd [#allocation6], 0
          %s145 = sshll.u32 %s2, 4
          %s146 = int_to_ptr.hbm [resolvable:$true] %s145
          %s147 = sshll.u32 [#allocation7], 4
          %s148 = int_to_ptr.vmem [resolvable:$true] %s147
          %150 = dma.hbm_to_vmem [thread:$0]  %s146, 32, %s148, [#allocation6]
        $region20: #{tpu_custom_call.1} parent=11 // pred_fallthru
          _
      $region12: #{tpu_custom_call.1} parent=5 // pred_fallthru
        _
      %p151 = scmp.lt.s32.totalorder %s16, 2
      // Predicated region
      $region21: #{tpu_custom_call.1} parent=5 // pred_check
        %p152 = pneg %p151
      $region22: #{tpu_custom_call.1} parent=5 // pred_check_branch
        %154 = sbr.rel (%p152) target = $region24
      $region23: #{tpu_custom_call.1} parent=5 // pred_region
        // Predicated region
        $region25: #{tpu_custom_call.1} parent=23 // pred_check
          %p155 = pneg %p36
        $region26: #{tpu_custom_call.1} parent=23 // pred_check_branch
          %157 = sbr.rel (%p155) target = $region28
        $region27: #{tpu_custom_call.1} parent=23 // pred_region
          %s158 = sand.u32 %s26, 1
          %s159 = scalar_lea.sflag [#allocation3], %s158
          %s160 = sand.u32 %s26, 1
          %s161 = smul.addr %s160, 16
          %s162 = scalar_lea.vmem [#allocation2], %s161
          %s163 = smul.u32 2, %s16
          %165 = vsyncadd %s159, 0
          %s166 = smul.addr %s163, 8
          %s167 = scalar_lea.hbm %s0, %s166
          %s168 = sshll.u32 %s167, 4
          %s169 = int_to_ptr.hbm [resolvable:$true] %s168
          %s170 = sshll.u32 %s162, 4
          %s171 = int_to_ptr.vmem [resolvable:$true] %s170
          %176 = dma.hbm_to_vmem [thread:$0]  %s169, 256, %s171, %s159, 128, 128, 8
        $region28: #{tpu_custom_call.1} parent=23 // pred_fallthru
          _
      $region24: #{tpu_custom_call.1} parent=5 // pred_fallthru
        _
      %p177 = scmp.le.s32.totalorder 1, %s16
      %p178 = scmp.lt.s32.totalorder %s16, 3
      %p179 = pnand %p177, %p178
      %p180 = pneg %p179
      // Predicated region
      $region29: #{tpu_custom_call.1} parent=5 // pred_check
        _
      $region30: #{tpu_custom_call.1} parent=5 // pred_check_branch
        %182 = sbr.rel (%p179) target = $region32
      $region31: #{tpu_custom_call.1} parent=5 // pred_region
        %s183 = ssub.s32 %s16, 1
        %s184 = sand.u32 %s29, 1
        %s185 = scalar_lea.sflag [#allocation3], %s184
        %s186 = sand.u32 %s29, 1
        %s187 = smul.addr %s186, 16
        %s188 = scalar_lea.vmem [#allocation2], %s187
        // Predicated region
        $region33: #{tpu_custom_call.1} parent=31 // pred_check
          %p189 = pneg %p42
        $region34: #{tpu_custom_call.1} parent=31 // pred_check_branch
          %191 = sbr.rel (%p189) target = $region36
        $region35: #{tpu_custom_call.1} parent=31 // pred_region
          %193 = dma.done %s185, 256
        $region36: #{tpu_custom_call.1} parent=31 // pred_fallthru
          _
        // Predicated region
        $region37: #{tpu_custom_call.1} parent=31 // pred_check
          %p194 = pneg %p63
        $region38: #{tpu_custom_call.1} parent=31 // pred_check_branch
          %196 = sbr.rel (%p194) target = $region40
        $region39: #{tpu_custom_call.1} parent=31 // pred_region
          %198 = dma.done [#allocation6], 1024
        $region40: #{tpu_custom_call.1} parent=31 // pred_fallthru
          _
        // Predicated region
        $region41: #{tpu_custom_call.1} parent=31 // pred_check
          %p199 = pneg %p84
        $region42: #{tpu_custom_call.1} parent=31 // pred_check_branch
          %201 = sbr.rel (%p199) target = $region44
        $region43: #{tpu_custom_call.1} parent=31 // pred_region
          %203 = dma.done [#allocation6], 32
        $region44: #{tpu_custom_call.1} parent=31 // pred_fallthru
          _
        %s204 = sand.u32 %s29, 1
        %s205 = scalar_lea.sflag [#allocation3], %s204
        %s206 = sand.u32 %s29, 1
        %s207 = smul.addr %s206, 16
        %s208 = scalar_lea.vmem [#allocation2], %s207
        %p209 = pneg %p42
        %p210 = pneg %p39
        %p211 = pneg %p63
        %p212 = pneg %p60
        %p213 = pneg %p84
        %p214 = pneg %p81
        %p215 = pneg %p110
        %p216 = pneg %p107
        %s217 = sand.u32 %s97, 1
        %s218 = scalar_lea.sflag [#allocation4], %s217
        %s219 = sand.u32 %s97, 1
        %s220 = smul.addr %s219, 16
        %s221 = scalar_lea.vmem [#allocation8], %s220
        %s222 = smul.u32 2, %s21
        %s223 = smul.u32 2, %s21
        %v224 = vld [vmem:[%s188] sm:$0xff]
        %v225 = vld [vmem:[%s188 + $0x8] sm:$0xff]
        %v226 = vld [vmem:[#allocation5] sm:$0xff]
        %v227 = vld [vmem:[#allocation5 + $0x8] sm:$0xff]
        %v228 = vld [vmem:[#allocation5 + $0x10] sm:$0xff]
        %v229 = vld [vmem:[#allocation5 + $0x18] sm:$0xff]
        %v230 = vld [vmem:[#allocation5 + $0x20] sm:$0xff]
        %v231 = vld [vmem:[#allocation5 + $0x28] sm:$0xff]
        %v232 = vld [vmem:[#allocation5 + $0x30] sm:$0xff]
        %v233 = vld [vmem:[#allocation5 + $0x38] sm:$0xff]
        %v234 = vld [vmem:[#allocation7] sm:$0x3]
        %v236 = vperm.slane %v234, 0
        %v237 = vperm.slane %v234, 1
        %vm240 = vcmask 261120
        %v242 = vsel %vm240, %v224, 0
        %v245 = vsel %vm240, %v225, 0
        %247 = vmatpush.msra.mxu0 0.0
        %248 = vmatpush.msra.mxu0 0.0
        %249 = vmatpush.msra.mxu0 0.0
        %250 = vmatpush.msra.mxu0 0.0
        %251 = vmatpush.msra.mxu0 0.0
        %252 = vmatpush.msra.mxu0 0.0
        %253 = vmatpush.msra.mxu0 0.0
        %254 = vmatpush.msra.mxu0 0.0
        %255 = vmatpush.msra.mxu0 0.0
        %256 = vmatpush.msra.mxu0 0.0
        %257 = vmatpush.msra.mxu0 0.0
        %258 = vmatpush.msra.mxu0 0.0
        %259 = vmatpush.msra.mxu0 %v232
        %260 = vmatpush.msra.mxu0 %v230
        %261 = vmatpush.msra.mxu0 %v228
        %262 = vmatpush.msra.mxu0 %v226
        %263 = vmatmul.f32.gmra.mxu0 %v242
        %v264 = vpop.f32.mrf.mxu0
        %v265 = vadd.f32 %v236, %v264
        %266 = vmatmul.f32.gmra.mxu0 %v245
        %v267 = vpop.f32.mrf.mxu0
        %v268 = vadd.f32 %v236, %v267
        %269 = vdwg.mxu0
        %270 = vmatpush.msra.mxu0 0.0
        %271 = vmatpush.msra.mxu0 0.0
        %272 = vmatpush.msra.mxu0 0.0
        %273 = vmatpush.msra.mxu0 0.0
        %274 = vmatpush.msra.mxu0 0.0
        %275 = vmatpush.msra.mxu0 0.0
        %276 = vmatpush.msra.mxu0 0.0
        %277 = vmatpush.msra.mxu0 0.0
        %278 = vmatpush.msra.mxu0 0.0
        %279 = vmatpush.msra.mxu0 0.0
        %280 = vmatpush.msra.mxu0 0.0
        %281 = vmatpush.msra.mxu0 0.0
        %282 = vmatpush.msra.mxu0 %v233
        %283 = vmatpush.msra.mxu0 %v231
        %284 = vmatpush.msra.mxu0 %v229
        %285 = vmatpush.msra.mxu0 %v227
        %286 = vmatmul.f32.gmra.mxu0 %v242
        %v287 = vpop.f32.mrf.mxu0
        %v288 = vadd.f32 %v237, %v287
        %289 = vmatmul.f32.gmra.mxu0 %v245
        %v290 = vpop.f32.mrf.mxu0
        %v291 = vadd.f32 %v237, %v290
        %292 = vdwg.mxu0
        %v293 = vmax.f32 %v265, 0.0
        %v294 = vmax.f32 %v268, 0.0
        %v295 = vxor.u32 %v265, 2147483648
        %v296 = vxor.u32 %v268, 2147483648
        %v297 = vmul.f32 %v295, 1.442695
        %v298 = vpow.pop %v297
        %v299 = vmul.f32 %v296, 1.442695
        %v300 = vpow.pop %v299
        %v301 = vadd.f32 %v298, 1.0
        %v302 = vadd.f32 %v300, 1.0
        %v303 = vrcp.pop %v301
        %v304 = vmul.f32 %v301, %v303
        %v305 = vsub.f32 1.0, %v304
        %v306 = vmul.f32 %v303, %v305
        %v307 = vadd.f32 %v303, %v306
        %vm308 = vweird.f32 %v301
        %vm309 = vweird.f32 %v303
        %vm310 = vmor %vm308, %vm309
        %v311 = vsel %vm310, %v303, %v307
        %v312 = vand.u32 2147483647, %v301
        %vm313 = vcmp.eq.f32.partialorder %v312, 8.507059e+37
        %v314 = vand.u32 %v301, 2147483648
        %v315 = vor.u32 1.1754944e-38, %v314
        %v316 = vsel %vm313, %v315, %v311
        %v317 = vmul.f32 1.0, %v316
        %v318 = vrcp.pop %v302
        %v319 = vmul.f32 %v302, %v318
        %v320 = vsub.f32 1.0, %v319
        %v321 = vmul.f32 %v318, %v320
        %v322 = vadd.f32 %v318, %v321
        %vm323 = vweird.f32 %v302
        %vm324 = vweird.f32 %v318
        %vm325 = vmor %vm323, %vm324
        %v326 = vsel %vm325, %v318, %v322
        %v327 = vand.u32 2147483647, %v302
        %vm328 = vcmp.eq.f32.partialorder %v327, 8.507059e+37
        %v329 = vand.u32 %v302, 2147483648
        %v330 = vor.u32 1.1754944e-38, %v329
        %v331 = vsel %vm328, %v330, %v326
        %v332 = vmul.f32 1.0, %v331
        %v333 = vsub.f32 %v293, %v288
        %v334 = vsub.f32 %v294, %v291
        %337 = vrot.lane.b32.xlu0 %v333, 64
        %v338 = vpop.permute.xlu0 %337
        %339 = vrot.lane.b32.xlu0 %v334, 64
        %v340 = vpop.permute.xlu0 %339
        %v343 = vmul.f32 %v317, %v338
        %v344 = vmul.f32 %v332, %v340
        %347 = vrot.lane.b32.xlu0 %v343, 64
        %v348 = vpop.permute.xlu0 %347
        %349 = vrot.lane.b32.xlu0 %v344, 64
        %v350 = vpop.permute.xlu0 %349
        %v353 = vadd.f32 %v288, %v348
        %v354 = vadd.f32 %v291, %v350
        %vm355 = vcmask 523264
        %356 = vst.msk [vmem:[%s221] sm:$0xff] %vm355, %v353
        %357 = vst.msk [vmem:[%s221 + $0x8] sm:$0xff] %vm355, %v354
        %s358 = sand.u32 %s97, 1
        %s359 = scalar_lea.sflag [#allocation4], %s358
        %s360 = sand.u32 %s97, 1
        %s361 = smul.addr %s360, 16
        %s362 = scalar_lea.vmem [#allocation8], %s361
        // Predicated region
        $region45: #{tpu_custom_call.1} parent=31 // pred_check
          %p363 = pneg %p107
        $region46: #{tpu_custom_call.1} parent=31 // pred_check_branch
          %365 = sbr.rel (%p363) target = $region48
        $region47: #{tpu_custom_call.1} parent=31 // pred_region
          %s366 = smul.u32 2, %s21
          %368 = vsyncadd %s359, 0
          %s369 = smul.addr %s366, 8
          %s370 = scalar_lea.hbm %s3, %s369
          %s371 = sshll.u32 %s362, 4
          %s372 = int_to_ptr.vmem [resolvable:$true] %s371
          %s373 = sshll.u32 %s370, 4
          %s374 = int_to_ptr.hbm [resolvable:$true] %s373
          %379 = dma.vmem_to_hbm [thread:$0]  %s372, 256, %s374, %s359, 128, 128, 8
        $region48: #{tpu_custom_call.1} parent=31 // pred_fallthru
          _
      $region32: #{tpu_custom_call.1} parent=5 // pred_fallthru
        _
      %p380 = scmp.le.s32.totalorder 2, %s16
      // Predicated region
      $region49: #{tpu_custom_call.1} parent=5 // pred_check
        %p381 = pneg %p380
      $region50: #{tpu_custom_call.1} parent=5 // pred_check_branch
        %383 = sbr.rel (%p381) target = $region52
      $region51: #{tpu_custom_call.1} parent=5 // pred_region
        %s384 = ssub.s32 %s16, 2
        // Predicated region
        $region53: #{tpu_custom_call.1} parent=51 // pred_check
          %p385 = pneg %p113
        $region54: #{tpu_custom_call.1} parent=51 // pred_check_branch
          %387 = sbr.rel (%p385) target = $region56
        $region55: #{tpu_custom_call.1} parent=51 // pred_region
          %s388 = sand.u32 %s98, 1
          %s389 = scalar_lea.sflag [#allocation4], %s388
          %s390 = sand.u32 %s98, 1
          %s391 = smul.addr %s390, 16
          %s392 = scalar_lea.vmem [#allocation8], %s391
          %394 = dma.done %s389, 256
        $region56: #{tpu_custom_call.1} parent=51 // pred_fallthru
          _
      $region52: #{tpu_custom_call.1} parent=5 // pred_fallthru
        _
    $region6: #{tpu_custom_call.1} parent=1 // loop_footer
      %s20 = sadd.s32 1, %s16
    $region7: #{tpu_custom_call.1} parent=1 // loop_footer_branch
      %15 = sbr.rel target = $region3
    $region8: #{tpu_custom_call.1} parent=1 // loop_exit
      _
    %395 = vsyncpa [#allocation3], 1
    %s396 = scalar_lea.sflag [#allocation3], 1
    %397 = vsyncpa %s396, 1
    %398 = vsyncpa [#allocation6], 1
    %399 = vsyncpa [#allocation4], 1
    %s400 = scalar_lea.sflag [#allocation4], 1
    %401 = vsyncpa %s400, 1

</llo_original>
